<compile_context>
chip_gen: v5e
topology: v5e:2x2
jax: 0.10.0
libtpu: 0.0.40
codegen_flags: <defaults>
</compile_context>

<pallas_src>
import jax
import jax.numpy as jnp
from jax.experimental import pallas as pl
from jax.experimental.pallas import tpu as pltpu


def mlp_res_kernel(x_ref, w1_ref, b1_ref, w2_ref, b2_ref, o_ref):
    # x_ref:  (1, C, TP)  tile of pixels for one batch sample (lanes = pixels)
    # w1_ref: (Hd, C)     fc1 conv weight
    # b1_ref: (Hd, 1)
    # w2_ref: (Hd, Hd)    fc2 conv weight
    # b2_ref: (Hd, 1)
    x = x_ref[0]                                                    # (C, TP)
    h = jnp.dot(w1_ref[...], x, preferred_element_type=jnp.float32) + b1_ref[...]
    h = jnp.maximum(h, 0.0)                                         # ReLU
    # dropout -> identity (eval mode)
    y = jnp.dot(w2_ref[...], h, preferred_element_type=jnp.float32) + b2_ref[...]
    o_ref[0] = (y + x).astype(o_ref.dtype)                          # residual add


def mlp_res_forward(x_nchw, w1, b1, w2, b2, *, tp=None, training=False):
    """x_nchw: [N, C, H, W]; w1: [Hd, C]; b1: [Hd]; w2: [Hd, Hd]; b2: [Hd]."""
    assert not training, "TODO(synk): training-mode dropout not implemented (eval only)"
    N, C, H, W = x_nchw.shape
    Hd, Cin = w1.shape
    assert Cin == C, f"fc1 in_channels {Cin} != input channels {C}"
    assert w2.shape == (Hd, Hd), f"fc2 weight shape {w2.shape} != {(Hd, Hd)}"
    # Residual add requires the channel count to be preserved.
    assert Hd == C, f"residual requires hidden_dim == input_dim, got {Hd} vs {C}"

    HW = H * W
    # Free reshape (contiguous): NCHW -> [N, C, H*W]; pixels are the lane dim.
    x3 = x_nchw.reshape(N, C, HW)

    if tp is None:
        if HW % 128 == 0:
            tp = min(HW, 2048)
            # keep enough grid steps for pipelining / v7x's 2 TensorCores
            while tp > 512 and N * pl.cdiv(HW, tp) < 8:
                tp //= 2
        else:
            # full-extent last dim is always a legal block shape
            tp = HW

    b1_r = b1.reshape(Hd, 1)
    b2_r = b2.reshape(Hd, 1)

    grid = (N, pl.cdiv(HW, tp))
    m_pixels = N * HW
    cost = pl.CostEstimate(
        flops=4 * m_pixels * C * Hd,                      # two matmuls
        transcendentals=0,
        bytes_accessed=2 * m_pixels * C * 4               # x read + out write
        + (Hd * C + Hd * Hd + 2 * Hd) * 4,                # weights + biases
    )

    out3 = pl.pallas_call(
        mlp_res_kernel,
        out_shape=jax.ShapeDtypeStruct((N, C, HW), x3.dtype),
        grid_spec=pltpu.PrefetchScalarGridSpec(
            num_scalar_prefetch=0,
            grid=grid,
            in_specs=[
                pl.BlockSpec((1, C, tp), lambda n, p: (n, 0, p)),   # x tile
                pl.BlockSpec((Hd, C), lambda n, p: (0, 0)),         # w1 (resident)
                pl.BlockSpec((Hd, 1), lambda n, p: (0, 0)),         # b1
                pl.BlockSpec((Hd, Hd), lambda n, p: (0, 0)),        # w2 (resident)
                pl.BlockSpec((Hd, 1), lambda n, p: (0, 0)),         # b2
            ],
            out_specs=pl.BlockSpec((1, C, tp), lambda n, p: (n, 0, p)),
        ),
        compiler_params=pltpu.CompilerParams(
            dimension_semantics=("parallel", "parallel"),
        ),
        cost_estimate=cost,
    )(x3, w1, b1_r, w2, b2_r)

    # Free reshape back to NCHW.
    return out3.reshape(N, C, H, W)


def reference_forward(x_nchw, w1, b1, w2, b2):
    # pure-JAX reference of the PyTorch forward (eval mode), directly in NCHW
    h = jnp.einsum("nchw,oc->nohw", x_nchw, w1) + b1[None, :, None, None]
    h = jnp.maximum(h, 0.0)
    y = jnp.einsum("nchw,oc->nohw", h, w2) + b2[None, :, None, None]
    return y + x_nchw


if __name__ == "__main__":
    # Residual add requires hidden_dim == input_dim in this module.
    N, C, H, W = 2, 32, 16, 16
    input_dim = hidden_dim = C

    key = jax.random.PRNGKey(0)
    k_x, k_w1, k_b1, k_w2, k_b2 = jax.random.split(key, 5)

    x = jax.random.normal(k_x, (N, C, H, W), dtype=jnp.float32)

    # Conv2d(1x1) params: weight (out, in, 1, 1) -> (out, in); bias (out,)
    bound1 = 1.0 / (input_dim ** 0.5)
    w1 = jax.random.uniform(k_w1, (hidden_dim, input_dim), jnp.float32, -bound1, bound1)
    b1 = jax.random.uniform(k_b1, (hidden_dim,), jnp.float32, -bound1, bound1)
    bound2 = 1.0 / (hidden_dim ** 0.5)
    w2 = jax.random.uniform(k_w2, (hidden_dim, hidden_dim), jnp.float32, -bound2, bound2)
    b2 = jax.random.uniform(k_b2, (hidden_dim,), jnp.float32, -bound2, bound2)

    out = mlp_res_forward(x, w1, b1, w2, b2)
    out = jax.block_until_ready(out)

    ref = reference_forward(x, w1, b1, w2, b2)
    assert out.shape == (N, C, H, W)
    assert jnp.allclose(out, ref, atol=1e-4, rtol=1e-4), "mismatch vs reference"

    print("KERNEL_OK")
</pallas_src>

<mosaic_0001>
module attributes {stable_mosaic.version = 11 : i64} {
  func.func @mlp_res_kernel(%arg0: i32, %arg1: i32, %arg2: memref<1x32x256xf32, #tpu.memory_space<vmem>>, %arg3: memref<32x32xf32, #tpu.memory_space<vmem>>, %arg4: memref<32x1xf32, #tpu.memory_space<vmem>>, %arg5: memref<32x32xf32, #tpu.memory_space<vmem>>, %arg6: memref<32x1xf32, #tpu.memory_space<vmem>>, %arg7: memref<1x32x256xf32, #tpu.memory_space<vmem>>) attributes {dimension_semantics = [#tpu.dimension_semantics<parallel>, #tpu.dimension_semantics<parallel>], iteration_bounds = array<i64: 2, 1>, scalar_prefetch = 0 : i64, scratch_operands = 0 : i64, tpu.core_type = #tpu.core_type<tc>, window_params = [{transform_indices = @transform_0, window_bounds = array<i64: 1, 32, 256>}, {pipeline_mode = #tpu.pipeline_mode<synchronous>, transform_indices = @transform_1, window_bounds = array<i64: 32, 32>}, {pipeline_mode = #tpu.pipeline_mode<synchronous>, transform_indices = @transform_2, window_bounds = array<i64: 32, 1>}, {pipeline_mode = #tpu.pipeline_mode<synchronous>, transform_indices = @transform_3, window_bounds = array<i64: 32, 32>}, {pipeline_mode = #tpu.pipeline_mode<synchronous>, transform_indices = @transform_4, window_bounds = array<i64: 32, 1>}, {transform_indices = @transform_5, window_bounds = array<i64: 1, 32, 256>}]} {
    %c0 = arith.constant 0 : index
    %c0_0 = arith.constant 0 : index
    %c0_1 = arith.constant 0 : index
    %0 = vector.load %arg2[%c0, %c0_0, %c0_1] : memref<1x32x256xf32, #tpu.memory_space<vmem>>, vector<1x32x256xf32>
    %1 = vector.shape_cast %0 : vector<1x32x256xf32> to vector<32x256xf32>
    %c0_2 = arith.constant 0 : index
    %c0_3 = arith.constant 0 : index
    %2 = vector.load %arg3[%c0_2, %c0_3] : memref<32x32xf32, #tpu.memory_space<vmem>>, vector<32x32xf32>
    %cst = arith.constant dense<0.000000e+00> : vector<32x256xf32>
    %3 = tpu.matmul %2, %1, %cst {dimension_numbers = #tpu.dot_dimension_numbers<[1], [0], [0], [1], [0, 0, 1, 1], [], []>} : vector<32x32xf32>, vector<32x256xf32>, vector<32x256xf32> -> vector<32x256xf32>
    %c0_4 = arith.constant 0 : index
    %c0_5 = arith.constant 0 : index
    %4 = vector.load %arg4[%c0_4, %c0_5] : memref<32x1xf32, #tpu.memory_space<vmem>>, vector<32x1xf32>
    %5 = vector.broadcast %4 : vector<32x1xf32> to vector<32x256xf32>
    %6 = arith.addf %3, %5 : vector<32x256xf32>
    %cst_6 = arith.constant 0.000000e+00 : f32
    %7 = vector.broadcast %cst_6 : f32 to vector<32x256xf32>
    %8 = arith.maximumf %6, %7 : vector<32x256xf32>
    %c0_7 = arith.constant 0 : index
    %c0_8 = arith.constant 0 : index
    %9 = vector.load %arg5[%c0_7, %c0_8] : memref<32x32xf32, #tpu.memory_space<vmem>>, vector<32x32xf32>
    %cst_9 = arith.constant dense<0.000000e+00> : vector<32x256xf32>
    %10 = tpu.matmul %9, %8, %cst_9 {dimension_numbers = #tpu.dot_dimension_numbers<[1], [0], [0], [1], [0, 0, 1, 1], [], []>} : vector<32x32xf32>, vector<32x256xf32>, vector<32x256xf32> -> vector<32x256xf32>
    %c0_10 = arith.constant 0 : index
    %c0_11 = arith.constant 0 : index
    %11 = vector.load %arg6[%c0_10, %c0_11] : memref<32x1xf32, #tpu.memory_space<vmem>>, vector<32x1xf32>
    %12 = vector.broadcast %11 : vector<32x1xf32> to vector<32x256xf32>
    %13 = arith.addf %10, %12 : vector<32x256xf32>
    %14 = arith.addf %13, %1 : vector<32x256xf32>
    %c0_12 = arith.constant 0 : index
    %c0_13 = arith.constant 0 : index
    %c0_14 = arith.constant 0 : index
    %15 = vector.load %arg7[%c0_12, %c0_13, %c0_14] : memref<1x32x256xf32, #tpu.memory_space<vmem>>, vector<1x32x256xf32>
    %16 = vector.shape_cast %15 : vector<1x32x256xf32> to vector<32x256xf32>
    %17 = vector.shape_cast %14 : vector<32x256xf32> to vector<1x32x256xf32>
    tpu.vector_store %arg7[%c0_12, %c0_13, %c0_14], %17 {strides = array<i32>} : memref<1x32x256xf32, #tpu.memory_space<vmem>>, vector<1x32x256xf32>,
    return
  }
  func.func @transform_0(%arg0: i32, %arg1: i32) -> (i32, i32, i32) {
    %c0_i32 = arith.constant 0 : i32
    %c0_i32_0 = arith.constant 0 : i32
    return %arg0, %c0_i32, %arg1 : i32, i32, i32
  }
  func.func @transform_1(%arg0: i32, %arg1: i32) -> (i32, i32) {
    %c0_i32 = arith.constant 0 : i32
    %c0_i32_0 = arith.constant 0 : i32
    %c0_i32_1 = arith.constant 0 : i32
    return %c0_i32, %c0_i32_0 : i32, i32
  }
  func.func @transform_2(%arg0: i32, %arg1: i32) -> (i32, i32) {
    %c0_i32 = arith.constant 0 : i32
    %c0_i32_0 = arith.constant 0 : i32
    %c0_i32_1 = arith.constant 0 : i32
    return %c0_i32, %c0_i32_0 : i32, i32
  }
  func.func @transform_3(%arg0: i32, %arg1: i32) -> (i32, i32) {
    %c0_i32 = arith.constant 0 : i32
    %c0_i32_0 = arith.constant 0 : i32
    %c0_i32_1 = arith.constant 0 : i32
    return %c0_i32, %c0_i32_0 : i32, i32
  }
  func.func @transform_4(%arg0: i32, %arg1: i32) -> (i32, i32) {
    %c0_i32 = arith.constant 0 : i32
    %c0_i32_0 = arith.constant 0 : i32
    %c0_i32_1 = arith.constant 0 : i32
    return %c0_i32, %c0_i32_0 : i32, i32
  }
  func.func @transform_5(%arg0: i32, %arg1: i32) -> (i32, i32, i32) {
    %c0_i32 = arith.constant 0 : i32
    %c0_i32_0 = arith.constant 0 : i32
    return %arg0, %c0_i32, %arg1 : i32, i32, i32
  }
}

</mosaic_0001>

<llo_original>
// kernel: tpu_custom_call.1
$region0: #{tpu_custom_call.1}
  #allocation0 [shape = 'u32[]', space=smem, size = 0x4, offset = 0x4, fixed_abs, tag = 'smem constant byte address 0x4 - core index']
  #allocation1 [shape = 'u32[72,128]{1,0:T(1,128)}', space=vmem, size = 0x9000, scoped, tag = 'internal scratch']
  %s0 = inlined_call_operand.hbm [shape: f32[2,32,256], index: 0, kind: input, shape index: {}]
  %s1 = inlined_call_operand.vmem [shape: f32[32,32], index: 1, kind: input, shape index: {}]
  %s2 = inlined_call_operand.vmem [shape: f32[32,1], index: 2, kind: input, shape index: {}]
  %s3 = inlined_call_operand.vmem [shape: f32[32,32], index: 3, kind: input, shape index: {}]
  %s4 = inlined_call_operand.vmem [shape: f32[32,1], index: 4, kind: input, shape index: {}]
  %s5 = inlined_call_operand.hbm [shape: f32[2,32,256], index: 5, kind: output, shape index: {}]
  %s6 = sld [smem:[#allocation0]]
  $region57: #{tpu_custom_call.1} parent=0
    _
  %s8 = ssub.s32 1, %s6
  %s9 = scalar_select 0, %s8, %s6
  $region1: #{tpu_custom_call.1} parent=0
    #allocation2 [shape = 'u8[65536]{0}', space=vmem, size = 0x10000, scoped, tag = 'input window, operand 0']
    #allocation3 [shape = 's32[2]{0}', space=sflag, size = 0x8, scoped, tag = 'scoped memory for tpu_custom_call.1']
    #allocation4 [shape = 's32[2]{0}', space=sflag, size = 0x8, scoped, tag = 'scoped memory for tpu_custom_call.1']
    #allocation5 [shape = 'u8[65536]{0}', space=vmem, size = 0x10000, scoped, tag = 'output window, operand 0']
    %10 = vsyncpa [#allocation3], 0
    %s11 = scalar_lea.sflag [#allocation3], 1
    %12 = vsyncpa %s11, 0
    %13 = vsyncpa [#allocation4], 0
    %s14 = scalar_lea.sflag [#allocation4], 1
    %15 = vsyncpa %s14, 0
    loop: start=0, step=1, limit=4
    $region2: #{tpu_custom_call.1} parent=1 // loop_pre_header
      _
    $region3: #{tpu_custom_call.1} parent=1 // loop_header
      %s17 = sphi 0, %s21
      %p18 = scmp.ge.s32.totalorder %s17, 4
      %s24 = sphi 0, %s36
      %s25 = sphi 0, %s32
      %s26 = sphi 0, %s24
      %s27 = sphi 0, %s25
      %s28 = sphi 0, %s26
      %s29 = sphi 0, %s27
      %s41 = sphi 0, %s43
      %s44 = sphi 0, %s41
      %s45 = sphi 0, %s44
      %s61 = sphi 0, %s45
      %s65 = sphi 0, %s65
      %s67 = sphi 0, %s65
      %s68 = sphi 0, %s67
      %s82 = sphi 0, %s68
      %s86 = sphi 0, %s86
      %s88 = sphi 0, %s86
      %s89 = sphi 0, %s88
      %s103 = sphi 0, %s89
      %s107 = sphi 0, %s107
      %s109 = sphi 0, %s107
      %s110 = sphi 0, %s109
      %s124 = sphi 0, %s110
      %s128 = sphi 0, %s128
      %s130 = sphi 0, %s128
      %s131 = sphi 0, %s130
      %s145 = sphi 0, %s131
      %s153 = sphi 0, %s155
      %s156 = sphi 0, %s153
      %s157 = sphi 0, %s156
      %s173 = sphi 0, %s157
    $region4: #{tpu_custom_call.1} parent=1 // loop_header_branch
      %20 = sbr.rel (%p18) target = $region8
    $region5: #{tpu_custom_call.1} parent=1 // loop_body
      %s22 = ssub.s32 %s17, 1
      %s23 = ssub.s32 %s17, 2
      %s30 = sadd.s32 1, %s25
      %p31 = scmp.ge.s32.totalorder %s30, 1
      %s32 = scalar_select %p31, 0, %s30
      %s33 = sadd.s32 1, %s24
      %s34 = scalar_select %p31, %s33, %s24
      %p35 = scmp.ge.s32.totalorder %s34, 2
      %s36 = scalar_select %p35, 0, %s34
      %s37 = ssub.s32 %s24, %s36
      %s38 = ssub.s32 %s25, %s32
      %s39 = sor.u32 %s37, %s38
      %p40 = scmp.eq.s32.totalorder %s39, 0
      %s42 = sadd.s32 %s41, 1
      %s43 = scalar_select %p40, %s41, %s42
      %p46 = pneg %p40
      %p47 = scmp.eq.s32.totalorder %s17, 1
      %p48 = por %p46, %p47
      %p49 = scmp.ne.s32.totalorder %s41, %s44
      %p50 = scmp.eq.s32.totalorder %s17, 0
      %p51 = por %p49, %p50
      %p52 = scmp.ne.s32.totalorder %s41, %s44
      %p53 = scmp.eq.s32.totalorder %s22, 1
      %p54 = por %p52, %p53
      %p55 = scmp.ne.s32.totalorder %s44, %s45
      %p56 = scmp.eq.s32.totalorder %s22, 0
      %p57 = por %p55, %p56
      %p58 = scmp.ne.s32.totalorder %s44, %s45
      %p59 = scmp.eq.s32.totalorder %s23, 1
      %p60 = por %p58, %p59
      %p62 = scmp.ne.s32.totalorder %s45, %s61
      %p63 = scmp.eq.s32.totalorder %s23, 0
      %p64 = por %p62, %p63
      %s66 = sadd.s32 %s65, 1
      %p69 = scmp.eq.s32.totalorder %s17, 1
      %p70 = scmp.ne.s32.totalorder %s65, %s67
      %p71 = scmp.eq.s32.totalorder %s17, 0
      %p72 = por %p70, %p71
      %p73 = scmp.ne.s32.totalorder %s65, %s67
      %p74 = scmp.eq.s32.totalorder %s22, 1
      %p75 = por %p73, %p74
      %p76 = scmp.ne.s32.totalorder %s67, %s68
      %p77 = scmp.eq.s32.totalorder %s22, 0
      %p78 = por %p76, %p77
      %p79 = scmp.ne.s32.totalorder %s67, %s68
      %p80 = scmp.eq.s32.totalorder %s23, 1
      %p81 = por %p79, %p80
      %p83 = scmp.ne.s32.totalorder %s68, %s82
      %p84 = scmp.eq.s32.totalorder %s23, 0
      %p85 = por %p83, %p84
      %s87 = sadd.s32 %s86, 1
      %p90 = scmp.eq.s32.totalorder %s17, 1
      %p91 = scmp.ne.s32.totalorder %s86, %s88
      %p92 = scmp.eq.s32.totalorder %s17, 0
      %p93 = por %p91, %p92
      %p94 = scmp.ne.s32.totalorder %s86, %s88
      %p95 = scmp.eq.s32.totalorder %s22, 1
      %p96 = por %p94, %p95
      %p97 = scmp.ne.s32.totalorder %s88, %s89
      %p98 = scmp.eq.s32.totalorder %s22, 0
      %p99 = por %p97, %p98
      %p100 = scmp.ne.s32.totalorder %s88, %s89
      %p101 = scmp.eq.s32.totalorder %s23, 1
      %p102 = por %p100, %p101
      %p104 = scmp.ne.s32.totalorder %s89, %s103
      %p105 = scmp.eq.s32.totalorder %s23, 0
      %p106 = por %p104, %p105
      %s108 = sadd.s32 %s107, 1
      %p111 = scmp.eq.s32.totalorder %s17, 1
      %p112 = scmp.ne.s32.totalorder %s107, %s109
      %p113 = scmp.eq.s32.totalorder %s17, 0
      %p114 = por %p112, %p113
      %p115 = scmp.ne.s32.totalorder %s107, %s109
      %p116 = scmp.eq.s32.totalorder %s22, 1
      %p117 = por %p115, %p116
      %p118 = scmp.ne.s32.totalorder %s109, %s110
      %p119 = scmp.eq.s32.totalorder %s22, 0
      %p120 = por %p118, %p119
      %p121 = scmp.ne.s32.totalorder %s109, %s110
      %p122 = scmp.eq.s32.totalorder %s23, 1
      %p123 = por %p121, %p122
      %p125 = scmp.ne.s32.totalorder %s110, %s124
      %p126 = scmp.eq.s32.totalorder %s23, 0
      %p127 = por %p125, %p126
      %s129 = sadd.s32 %s128, 1
      %p132 = scmp.eq.s32.totalorder %s17, 1
      %p133 = scmp.ne.s32.totalorder %s128, %s130
      %p134 = scmp.eq.s32.totalorder %s17, 0
      %p135 = por %p133, %p134
      %p136 = scmp.ne.s32.totalorder %s128, %s130
      %p137 = scmp.eq.s32.totalorder %s22, 1
      %p138 = por %p136, %p137
      %p139 = scmp.ne.s32.totalorder %s130, %s131
      %p140 = scmp.eq.s32.totalorder %s22, 0
      %p141 = por %p139, %p140
      %p142 = scmp.ne.s32.totalorder %s130, %s131
      %p143 = scmp.eq.s32.totalorder %s23, 1
      %p144 = por %p142, %p143
      %p146 = scmp.ne.s32.totalorder %s131, %s145
      %p147 = scmp.eq.s32.totalorder %s23, 0
      %p148 = por %p146, %p147
      %s149 = ssub.s32 %s24, %s36
      %s150 = ssub.s32 %s25, %s32
      %s151 = sor.u32 %s149, %s150
      %p152 = scmp.eq.s32.totalorder %s151, 0
      %s154 = sadd.s32 %s153, 1
      %s155 = scalar_select %p152, %s153, %s154
      %p158 = pneg %p152
      %p159 = scmp.eq.s32.totalorder %s17, 1
      %p160 = por %p158, %p159
      %p161 = scmp.ne.s32.totalorder %s153, %s156
      %p162 = scmp.eq.s32.totalorder %s17, 0
      %p163 = por %p161, %p162
      %p164 = scmp.ne.s32.totalorder %s153, %s156
      %p165 = scmp.eq.s32.totalorder %s22, 1
      %p166 = por %p164, %p165
      %p167 = scmp.ne.s32.totalorder %s156, %s157
      %p168 = scmp.eq.s32.totalorder %s22, 0
      %p169 = por %p167, %p168
      %p170 = scmp.ne.s32.totalorder %s156, %s157
      %p171 = scmp.eq.s32.totalorder %s23, 1
      %p172 = por %p170, %p171
      %p174 = scmp.ne.s32.totalorder %s157, %s173
      %p175 = scmp.eq.s32.totalorder %s23, 0
      %p176 = por %p174, %p175
      %p177 = scmp.le.s32.totalorder 1, %s17
      %p178 = scmp.lt.s32.totalorder %s17, 3
      %p179 = pnand %p177, %p178
      %p180 = pneg %p179
      // Predicated region
      $region9: #{tpu_custom_call.1} parent=5 // pred_check
        _
      $region10: #{tpu_custom_call.1} parent=5 // pred_check_branch
        %182 = sbr.rel (%p179) target = $region12
      $region11: #{tpu_custom_call.1} parent=5 // pred_region
        %s183 = ssub.s32 %s17, 1
        // Predicated region
        $region13: #{tpu_custom_call.1} parent=11 // pred_check
          %p184 = pneg %p78
        $region14: #{tpu_custom_call.1} parent=11 // pred_check_branch
          %186 = sbr.rel (%p184) target = $region16
        $region15: #{tpu_custom_call.1} parent=11 // pred_region
          _
        $region16: #{tpu_custom_call.1} parent=11 // pred_fallthru
          _
        // Predicated region
        $region17: #{tpu_custom_call.1} parent=11 // pred_check
          %p187 = pneg %p99
        $region18: #{tpu_custom_call.1} parent=11 // pred_check_branch
          %189 = sbr.rel (%p187) target = $region20
        $region19: #{tpu_custom_call.1} parent=11 // pred_region
          _
        $region20: #{tpu_custom_call.1} parent=11 // pred_fallthru
          _
        // Predicated region
        $region21: #{tpu_custom_call.1} parent=11 // pred_check
          %p190 = pneg %p120
        $region22: #{tpu_custom_call.1} parent=11 // pred_check_branch
          %192 = sbr.rel (%p190) target = $region24
        $region23: #{tpu_custom_call.1} parent=11 // pred_region
          _
        $region24: #{tpu_custom_call.1} parent=11 // pred_fallthru
          _
        // Predicated region
        $region25: #{tpu_custom_call.1} parent=11 // pred_check
          %p193 = pneg %p141
        $region26: #{tpu_custom_call.1} parent=11 // pred_check_branch
          %195 = sbr.rel (%p193) target = $region28
        $region27: #{tpu_custom_call.1} parent=11 // pred_region
          _
        $region28: #{tpu_custom_call.1} parent=11 // pred_fallthru
          _
      $region12: #{tpu_custom_call.1} parent=5 // pred_fallthru
        _
      %p196 = scmp.lt.s32.totalorder %s17, 2
      // Predicated region
      $region29: #{tpu_custom_call.1} parent=5 // pred_check
        %p197 = pneg %p196
      $region30: #{tpu_custom_call.1} parent=5 // pred_check_branch
        %199 = sbr.rel (%p197) target = $region32
      $region31: #{tpu_custom_call.1} parent=5 // pred_region
        // Predicated region
        $region33: #{tpu_custom_call.1} parent=31 // pred_check
          %p200 = pneg %p51
        $region34: #{tpu_custom_call.1} parent=31 // pred_check_branch
          %202 = sbr.rel (%p200) target = $region36
        $region35: #{tpu_custom_call.1} parent=31 // pred_region
          %s203 = sand.u32 %s41, 1
          %s204 = scalar_lea.sflag [#allocation3], %s203
          %s205 = sand.u32 %s41, 1
          %s206 = smul.addr %s205, 64
          %s207 = scalar_lea.vmem [#allocation2], %s206
          %s208 = smul.u32 2, %s25
          %210 = vsyncadd %s204, 0
          %s211 = smul.addr %s24, 8
          %s212 = sadd.s32 %s208, %s211
          %s213 = smul.addr %s212, 8
          %s214 = scalar_lea.hbm %s0, %s213
          %s215 = sshll.u32 %s214, 4
          %s216 = int_to_ptr.hbm [resolvable:$true] %s215
          %s217 = sshll.u32 %s207, 4
          %s218 = int_to_ptr.vmem [resolvable:$true] %s217
          %223 = dma.hbm_to_vmem [thread:$0]  %s216, 1024, %s218, %s204, 256, 256, 16
        $region36: #{tpu_custom_call.1} parent=31 // pred_fallthru
          _
      $region32: #{tpu_custom_call.1} parent=5 // pred_fallthru
        _
      %p224 = scmp.le.s32.totalorder 1, %s17
      %p225 = scmp.lt.s32.totalorder %s17, 3
      %p226 = pnand %p224, %p225
      %p227 = pneg %p226
      // Predicated region
      $region37: #{tpu_custom_call.1} parent=5 // pred_check
        _
      $region38: #{tpu_custom_call.1} parent=5 // pred_check_branch
        %229 = sbr.rel (%p226) target = $region40
      $region39: #{tpu_custom_call.1} parent=5 // pred_region
        %s230 = ssub.s32 %s17, 1
        %s231 = sand.u32 %s44, 1
        %s232 = scalar_lea.sflag [#allocation3], %s231
        %s233 = sand.u32 %s44, 1
        %s234 = smul.addr %s233, 64
        %s235 = scalar_lea.vmem [#allocation2], %s234
        // Predicated region
        $region41: #{tpu_custom_call.1} parent=39 // pred_check
          %p236 = pneg %p57
        $region42: #{tpu_custom_call.1} parent=39 // pred_check_branch
          %238 = sbr.rel (%p236) target = $region44
        $region43: #{tpu_custom_call.1} parent=39 // pred_region
          %240 = dma.done %s232, 1024
        $region44: #{tpu_custom_call.1} parent=39 // pred_fallthru
          _
        %s241 = sand.u32 %s44, 1
        %s242 = scalar_lea.sflag [#allocation3], %s241
        %s243 = sand.u32 %s44, 1
        %s244 = smul.addr %s243, 64
        %s245 = scalar_lea.vmem [#allocation2], %s244
        %p246 = pneg %p57
        %p247 = pneg %p54
        %p248 = pneg %p78
        %p249 = pneg %p75
        %p250 = pneg %p99
        %p251 = pneg %p96
        %p252 = pneg %p120
        %p253 = pneg %p117
        %p254 = pneg %p141
        %p255 = pneg %p138
        %p256 = pneg %p169
        %p257 = pneg %p166
        %s258 = sand.u32 %s156, 1
        %s259 = scalar_lea.sflag [#allocation4], %s258
        %s260 = sand.u32 %s156, 1
        %s261 = smul.addr %s260, 64
        %s262 = scalar_lea.vmem [#allocation5], %s261
        %s263 = smul.u32 2, %s27
        %s264 = smul.u32 2, %s27
        %v265 = vld [vmem:[%s235] sm:$0xff]
        %v266 = vld [vmem:[%s235 + $0x8] sm:$0xff]
        %v267 = vld [vmem:[%s235 + $0x10] sm:$0xff]
        %v268 = vld [vmem:[%s235 + $0x18] sm:$0xff]
        %v269 = vld [vmem:[%s235 + $0x20] sm:$0xff]
        %v270 = vld [vmem:[%s235 + $0x28] sm:$0xff]
        %v271 = vld [vmem:[%s235 + $0x30] sm:$0xff]
        %v272 = vld [vmem:[%s235 + $0x38] sm:$0xff]
        %v273 = vld [vmem:[%s1] sm:$0xff]
        %v274 = vld [vmem:[%s1 + $0x8] sm:$0xff]
        %v275 = vld [vmem:[%s1 + $0x10] sm:$0xff]
        %v276 = vld [vmem:[%s1 + $0x18] sm:$0xff]
        %v277 = vld [vmem:[%s2] sm:$0xff]
        %v278 = vld [vmem:[%s2 + $0x8] sm:$0xff]
        %v279 = vld [vmem:[%s2 + $0x10] sm:$0xff]
        %v280 = vld [vmem:[%s2 + $0x18] sm:$0xff]
        %282 = vset.pattern.permute.xlu0 0
        %283 = vperm.xlu0 %282, %v277
        %v284 = vpop.permute.xlu0 %283
        %287 = vset.pattern.permute.xlu0 0
        %288 = vperm.xlu0 %287, %v278
        %v289 = vpop.permute.xlu0 %288
        %292 = vset.pattern.permute.xlu0 0
        %293 = vperm.xlu0 %292, %v279
        %v294 = vpop.permute.xlu0 %293
        %297 = vset.pattern.permute.xlu0 0
        %298 = vperm.xlu0 %297, %v280
        %v299 = vpop.permute.xlu0 %298
        %vm301 = vcmask 261120
        %v303 = vsel %vm301, %v273, 0
        %v306 = vsel %vm301, %v274, 0
        %v309 = vsel %vm301, %v275, 0
        %v312 = vsel %vm301, %v276, 0
        %314 = vmatpush.msra.mxu0 0.0
        %315 = vmatpush.msra.mxu0 0.0
        %316 = vmatpush.msra.mxu0 0.0
        %317 = vmatpush.msra.mxu0 0.0
        %318 = vmatpush.msra.mxu0 0.0
        %319 = vmatpush.msra.mxu0 0.0
        %320 = vmatpush.msra.mxu0 0.0
        %321 = vmatpush.msra.mxu0 0.0
        %322 = vmatpush.msra.mxu0 0.0
        %323 = vmatpush.msra.mxu0 0.0
        %324 = vmatpush.msra.mxu0 0.0
        %325 = vmatpush.msra.mxu0 0.0
        %326 = vmatpush.msra.mxu0 %v271
        %327 = vmatpush.msra.mxu0 %v269
        %328 = vmatpush.msra.mxu0 %v267
        %329 = vmatpush.msra.mxu0 %v265
        %330 = vmatmul.f32.gmra.mxu0 %v303
        %v331 = vpop.f32.mrf.mxu0
        %v332 = vadd.f32 %v284, %v331
        %333 = vmatmul.f32.gmra.mxu0 %v306
        %v334 = vpop.f32.mrf.mxu0
        %v335 = vadd.f32 %v289, %v334
        %336 = vmatmul.f32.gmra.mxu0 %v309
        %v337 = vpop.f32.mrf.mxu0
        %v338 = vadd.f32 %v294, %v337
        %339 = vmatmul.f32.gmra.mxu0 %v312
        %v340 = vpop.f32.mrf.mxu0
        %v341 = vadd.f32 %v299, %v340
        %342 = vdwg.mxu0
        %343 = vmatpush.msra.mxu0 0.0
        %344 = vmatpush.msra.mxu0 0.0
        %345 = vmatpush.msra.mxu0 0.0
        %346 = vmatpush.msra.mxu0 0.0
        %347 = vmatpush.msra.mxu0 0.0
        %348 = vmatpush.msra.mxu0 0.0
        %349 = vmatpush.msra.mxu0 0.0
        %350 = vmatpush.msra.mxu0 0.0
        %351 = vmatpush.msra.mxu0 0.0
        %352 = vmatpush.msra.mxu0 0.0
        %353 = vmatpush.msra.mxu0 0.0
        %354 = vmatpush.msra.mxu0 0.0
        %355 = vmatpush.msra.mxu0 %v272
        %356 = vmatpush.msra.mxu0 %v270
        %357 = vmatpush.msra.mxu0 %v268
        %358 = vmatpush.msra.mxu0 %v266
        %359 = vmatmul.f32.gmra.mxu0 %v303
        %v360 = vpop.f32.mrf.mxu0
        %v361 = vadd.f32 %v284, %v360
        %362 = vmatmul.f32.gmra.mxu0 %v306
        %v363 = vpop.f32.mrf.mxu0
        %v364 = vadd.f32 %v289, %v363
        %365 = vmatmul.f32.gmra.mxu0 %v309
        %v366 = vpop.f32.mrf.mxu0
        %v367 = vadd.f32 %v294, %v366
        %368 = vmatmul.f32.gmra.mxu0 %v312
        %v369 = vpop.f32.mrf.mxu0
        %v370 = vadd.f32 %v299, %v369
        %371 = vdwg.mxu0
        %v372 = vmax.f32 %v332, 0.0
        %v373 = vmax.f32 %v361, 0.0
        %v374 = vmax.f32 %v335, 0.0
        %v375 = vmax.f32 %v364, 0.0
        %v376 = vmax.f32 %v338, 0.0
        %v377 = vmax.f32 %v367, 0.0
        %v378 = vmax.f32 %v341, 0.0
        %v379 = vmax.f32 %v370, 0.0
        %v380 = vld [vmem:[%s3] sm:$0xff]
        %v381 = vld [vmem:[%s3 + $0x8] sm:$0xff]
        %v382 = vld [vmem:[%s3 + $0x10] sm:$0xff]
        %v383 = vld [vmem:[%s3 + $0x18] sm:$0xff]
        %v384 = vld [vmem:[%s4] sm:$0xff]
        %v385 = vld [vmem:[%s4 + $0x8] sm:$0xff]
        %v386 = vld [vmem:[%s4 + $0x10] sm:$0xff]
        %v387 = vld [vmem:[%s4 + $0x18] sm:$0xff]
        %389 = vset.pattern.permute.xlu0 0
        %390 = vperm.xlu0 %389, %v384
        %v391 = vpop.permute.xlu0 %390
        %394 = vset.pattern.permute.xlu0 0
        %395 = vperm.xlu0 %394, %v385
        %v396 = vpop.permute.xlu0 %395
        %399 = vset.pattern.permute.xlu0 0
        %400 = vperm.xlu0 %399, %v386
        %v401 = vpop.permute.xlu0 %400
        %404 = vset.pattern.permute.xlu0 0
        %405 = vperm.xlu0 %404, %v387
        %v406 = vpop.permute.xlu0 %405
        %v409 = vsel %vm301, %v380, 0
        %v412 = vsel %vm301, %v381, 0
        %v415 = vsel %vm301, %v382, 0
        %v418 = vsel %vm301, %v383, 0
        %420 = vmatpush.msra.mxu0 0.0
        %421 = vmatpush.msra.mxu0 0.0
        %422 = vmatpush.msra.mxu0 0.0
        %423 = vmatpush.msra.mxu0 0.0
        %424 = vmatpush.msra.mxu0 0.0
        %425 = vmatpush.msra.mxu0 0.0
        %426 = vmatpush.msra.mxu0 0.0
        %427 = vmatpush.msra.mxu0 0.0
        %428 = vmatpush.msra.mxu0 0.0
        %429 = vmatpush.msra.mxu0 0.0
        %430 = vmatpush.msra.mxu0 0.0
        %431 = vmatpush.msra.mxu0 0.0
        %432 = vmatpush.msra.mxu0 %v378
        %433 = vmatpush.msra.mxu0 %v376
        %434 = vmatpush.msra.mxu0 %v374
        %435 = vmatpush.msra.mxu0 %v372
        %436 = vmatmul.f32.gmra.mxu0 %v409
        %v437 = vpop.f32.mrf.mxu0
        %v438 = vadd.f32 %v391, %v437
        %439 = vmatmul.f32.gmra.mxu0 %v412
        %v440 = vpop.f32.mrf.mxu0
        %v441 = vadd.f32 %v396, %v440
        %442 = vmatmul.f32.gmra.mxu0 %v415
        %v443 = vpop.f32.mrf.mxu0
        %v444 = vadd.f32 %v401, %v443
        %445 = vmatmul.f32.gmra.mxu0 %v418
        %v446 = vpop.f32.mrf.mxu0
        %v447 = vadd.f32 %v406, %v446
        %448 = vdwg.mxu0
        %449 = vmatpush.msra.mxu0 0.0
        %450 = vmatpush.msra.mxu0 0.0
        %451 = vmatpush.msra.mxu0 0.0
        %452 = vmatpush.msra.mxu0 0.0
        %453 = vmatpush.msra.mxu0 0.0
        %454 = vmatpush.msra.mxu0 0.0
        %455 = vmatpush.msra.mxu0 0.0
        %456 = vmatpush.msra.mxu0 0.0
        %457 = vmatpush.msra.mxu0 0.0
        %458 = vmatpush.msra.mxu0 0.0
        %459 = vmatpush.msra.mxu0 0.0
        %460 = vmatpush.msra.mxu0 0.0
        %461 = vmatpush.msra.mxu0 %v379
        %462 = vmatpush.msra.mxu0 %v377
        %463 = vmatpush.msra.mxu0 %v375
        %464 = vmatpush.msra.mxu0 %v373
        %465 = vmatmul.f32.gmra.mxu0 %v409
        %v466 = vpop.f32.mrf.mxu0
        %v467 = vadd.f32 %v391, %v466
        %468 = vmatmul.f32.gmra.mxu0 %v412
        %v469 = vpop.f32.mrf.mxu0
        %v470 = vadd.f32 %v396, %v469
        %471 = vmatmul.f32.gmra.mxu0 %v415
        %v472 = vpop.f32.mrf.mxu0
        %v473 = vadd.f32 %v401, %v472
        %474 = vmatmul.f32.gmra.mxu0 %v418
        %v475 = vpop.f32.mrf.mxu0
        %v476 = vadd.f32 %v406, %v475
        %477 = vdwg.mxu0
        %v478 = vadd.f32 %v438, %v265
        %v479 = vadd.f32 %v467, %v266
        %v480 = vadd.f32 %v441, %v267
        %v481 = vadd.f32 %v470, %v268
        %v482 = vadd.f32 %v444, %v269
        %v483 = vadd.f32 %v473, %v270
        %v484 = vadd.f32 %v447, %v271
        %v485 = vadd.f32 %v476, %v272
        %486 = vst [vmem:[%s262] sm:$0xff] %v478
        %487 = vst [vmem:[%s262 + $0x8] sm:$0xff] %v479
        %488 = vst [vmem:[%s262 + $0x10] sm:$0xff] %v480
        %489 = vst [vmem:[%s262 + $0x18] sm:$0xff] %v481
        %490 = vst [vmem:[%s262 + $0x20] sm:$0xff] %v482
        %491 = vst [vmem:[%s262 + $0x28] sm:$0xff] %v483
        %492 = vst [vmem:[%s262 + $0x30] sm:$0xff] %v484
        %493 = vst [vmem:[%s262 + $0x38] sm:$0xff] %v485
        %s494 = sand.u32 %s156, 1
        %s495 = scalar_lea.sflag [#allocation4], %s494
        %s496 = sand.u32 %s156, 1
        %s497 = smul.addr %s496, 64
        %s498 = scalar_lea.vmem [#allocation5], %s497
        // Predicated region
        $region45: #{tpu_custom_call.1} parent=39 // pred_check
          %p499 = pneg %p166
        $region46: #{tpu_custom_call.1} parent=39 // pred_check_branch
          %501 = sbr.rel (%p499) target = $region48
        $region47: #{tpu_custom_call.1} parent=39 // pred_region
          %s502 = smul.u32 2, %s27
          %504 = vsyncadd %s495, 0
          %s505 = smul.addr %s26, 8
          %s506 = sadd.s32 %s502, %s505
          %s507 = smul.addr %s506, 8
          %s508 = scalar_lea.hbm %s5, %s507
          %s509 = sshll.u32 %s498, 4
          %s510 = int_to_ptr.vmem [resolvable:$true] %s509
          %s511 = sshll.u32 %s508, 4
          %s512 = int_to_ptr.hbm [resolvable:$true] %s511
          %517 = dma.vmem_to_hbm [thread:$0]  %s510, 1024, %s512, %s495, 256, 256, 16
        $region48: #{tpu_custom_call.1} parent=39 // pred_fallthru
          _
      $region40: #{tpu_custom_call.1} parent=5 // pred_fallthru
        _
      %p518 = scmp.le.s32.totalorder 2, %s17
      // Predicated region
      $region49: #{tpu_custom_call.1} parent=5 // pred_check
        %p519 = pneg %p518
      $region50: #{tpu_custom_call.1} parent=5 // pred_check_branch
        %521 = sbr.rel (%p519) target = $region52
      $region51: #{tpu_custom_call.1} parent=5 // pred_region
        %s522 = ssub.s32 %s17, 2
        // Predicated region
        $region53: #{tpu_custom_call.1} parent=51 // pred_check
          %p523 = pneg %p172
        $region54: #{tpu_custom_call.1} parent=51 // pred_check_branch
          %525 = sbr.rel (%p523) target = $region56
        $region55: #{tpu_custom_call.1} parent=51 // pred_region
          %s526 = sand.u32 %s157, 1
          %s527 = scalar_lea.sflag [#allocation4], %s526
          %s528 = sand.u32 %s157, 1
          %s529 = smul.addr %s528, 64
          %s530 = scalar_lea.vmem [#allocation5], %s529
          %532 = dma.done %s527, 1024
        $region56: #{tpu_custom_call.1} parent=51 // pred_fallthru
          _
      $region52: #{tpu_custom_call.1} parent=5 // pred_fallthru
        _
    $region6: #{tpu_custom_call.1} parent=1 // loop_footer
      %s21 = sadd.s32 1, %s17
    $region7: #{tpu_custom_call.1} parent=1 // loop_footer_branch
      %16 = sbr.rel target = $region3
    $region8: #{tpu_custom_call.1} parent=1 // loop_exit
      _
    %533 = vsyncpa [#allocation3], 1
    %s534 = scalar_lea.sflag [#allocation3], 1
    %535 = vsyncpa %s534, 1
    %536 = vsyncpa [#allocation4], 1
    %s537 = scalar_lea.sflag [#allocation4], 1
    %538 = vsyncpa %s537, 1

</llo_original>
